<compile_context>
chip_gen: v7x
topology: tpu7x:2x2x1
jax: 0.10.0
libtpu: 0.0.40
codegen_flags: <defaults>
</compile_context>

<pallas_src>
import functools

import jax
import jax.numpy as jnp
from jax.experimental import pallas as pl
from jax.experimental.pallas import tpu as pltpu


def _lowbias32(x):
    """lowbias32 integer finalizer (uint32, wrapping arithmetic) — avalanche-quality hash."""
    x = x ^ (x >> 16)
    x = x * jnp.uint32(0x7FEB352D)
    x = x ^ (x >> 15)
    x = x * jnp.uint32(0x846CA68B)
    x = x ^ (x >> 16)
    return x


def _dropout_kernel(seed_ref, x_ref, o_ref, *, keep_prob: float):
    rows, cols = x_ref.shape  # static tile shape (block_rows, lanes)

    # Global flat element index of every lane in this tile (uint32).  Folding
    # pl.program_id into the counter gives every grid step a disjoint random
    # stream — no repeated/correlated masks across tiles.
    pid = pl.program_id(0).astype(jnp.uint32)
    block_off = pid * jnp.uint32(rows * cols)
    row_idx = jax.lax.broadcasted_iota(jnp.uint32, (rows, cols), 0)
    col_idx = jax.lax.broadcasted_iota(jnp.uint32, (rows, cols), 1)
    idx = block_off + row_idx * jnp.uint32(cols) + col_idx

    seed = seed_ref[0].astype(jnp.uint32)
    bits = _lowbias32(idx + seed * jnp.uint32(0x9E3779B9))

    # P(keep) = threshold / 2^32 == keep_prob.  (For keep_prob ~ 1.0 the clamp
    # to 2^32-1 adds a ~2^-32 extra drop probability — negligible.)
    threshold = jnp.uint32(min(int(keep_prob * (2 ** 32)), 2 ** 32 - 1))
    keep = bits < threshold

    # Inverted-dropout scaling, computed in the input dtype (bf16-native on
    # v6e/v7x; f32 inputs stay f32).
    x = x_ref[...]
    scale = jnp.asarray(1.0 / keep_prob, dtype=x.dtype)
    o_ref[...] = jnp.where(keep, x * scale, jnp.zeros_like(x))


def _lane_dense_2d(total: int):
    """Pick a lane-dense slab (rows, lanes, pad): lanes is a large multiple of 128."""
    for lanes in (1024, 512, 256, 128):
        if total % lanes == 0:
            return total // lanes, lanes, 0
    lanes = 128
    padded = ((total + lanes - 1) // lanes) * lanes
    return padded // lanes, lanes, padded - total


def dropout(x: jax.Array, p: float, *, seed: int = 0, training: bool = True) -> jax.Array:
    """Pallas-TPU dropout matching the PyTorch module's forward.

    Callers must pass a fresh `seed` per step (PyTorch advances a global RNG
    state implicitly; here the state is explicit).
    """
    if not training or p == 0.0:
        return x
    if p >= 1.0:
        return jnp.zeros_like(x)
    keep_prob = 1.0 - p

    orig_shape = x.shape
    total = x.size
    rows, lanes, pad = _lane_dense_2d(total)

    flat = x.reshape(-1)
    if pad:
        flat = jnp.pad(flat, (0, pad))
    x2d = flat.reshape(rows, lanes)

    # ~2 MiB tiles: with input + output each double-buffered (~4 live buffers,
    # ~8 MiB) this fits the default scoped-VMEM budget on v5e/v6e/v7x while
    # staying big enough to amortize the ~0.35 us per-grid-step overhead.
    target_tile_bytes = 2 * 1024 * 1024
    itemsize = x2d.dtype.itemsize
    max_rows = max(8, (target_tile_bytes // (lanes * itemsize)) // 8 * 8)
    block_rows = rows if rows <= max_rows else max_rows
    grid = (pl.cdiv(rows, block_rows),)

    seed_arr = jnp.array([seed], dtype=jnp.int32)

    out2d = pl.pallas_call(
        functools.partial(_dropout_kernel, keep_prob=keep_prob),
        out_shape=jax.ShapeDtypeStruct(x2d.shape, x2d.dtype),
        grid=grid,
        in_specs=[
            pl.BlockSpec(memory_space=pltpu.MemorySpace.SMEM),    # seed scalar
            pl.BlockSpec((block_rows, lanes), lambda i: (i, 0)),  # x tile
        ],
        out_specs=pl.BlockSpec((block_rows, lanes), lambda i: (i, 0)),
        input_output_aliases={1: 0},   # x2d is never needed after the kernel
        compiler_params=pltpu.CompilerParams(
            dimension_semantics=("parallel",),  # shard row tiles over v7x's 2 TCs
        ),
        cost_estimate=pl.CostEstimate(
            flops=2 * total,
            transcendentals=0,
            bytes_accessed=2 * total * itemsize,
        ),
    )(seed_arr, x2d)

    out_flat = out2d.reshape(-1)
    if pad:
        out_flat = out_flat[:total]
    return out_flat.reshape(orig_shape)


if __name__ == "__main__":
    key = jax.random.PRNGKey(0)
    # NCHW input, small shapes: batch=2, channels=4, spatial=16x16
    x = jax.random.normal(key, (2, 4, 16, 16), dtype=jnp.float32)

    p = 0.25
    y_train = jax.block_until_ready(dropout(x, p, seed=0, training=True))

    # Sanity checks on the dropout semantics.
    kept = y_train != 0.0
    # Kept entries must equal x / (1 - p) (up to f32 rounding of the scale).
    assert jnp.allclose(jnp.where(kept, y_train, 0.0),
                        jnp.where(kept, x / (1.0 - p), 0.0),
                        rtol=1e-5, atol=1e-6)
    # Keep-rate should be roughly (1 - p).
    keep_rate = float(jnp.mean(kept.astype(jnp.float32)))
    assert abs(keep_rate - (1.0 - p)) < 0.1, keep_rate

    # Different seeds produce different masks.
    y_other = jax.block_until_ready(dropout(x, p, seed=1, training=True))
    assert not jnp.array_equal(y_train, y_other)

    # Eval mode is the identity.
    y_eval = jax.block_until_ready(dropout(x, p, seed=0, training=False))
    assert jnp.array_equal(y_eval, x)

    print("KERNEL_OK")
</pallas_src>

<mosaic_0001>
module attributes {stable_mosaic.version = 11 : i64} {
  func.func @_dropout_kernel(%arg0: i32, %arg1: memref<1xi32, #tpu.memory_space<smem>>, %arg2: memref<2x1024xf32, #tpu.memory_space<vmem>>, %arg3: memref<2x1024xf32, #tpu.memory_space<vmem>>) attributes {dimension_semantics = [#tpu.dimension_semantics<parallel>], iteration_bounds = array<i64: 1>, scalar_prefetch = 0 : i64, scratch_operands = 0 : i64, tpu.core_type = #tpu.core_type<tc>, window_params = [{transform_indices = @transform_0, window_bounds = array<i64: 1>}, {transform_indices = @transform_1, window_bounds = array<i64: 2, 1024>}, {transform_indices = @transform_2, window_bounds = array<i64: 2, 1024>}]} {
    %c2048_i32 = arith.constant 2048 : i32
    %0 = arith.muli %arg0, %c2048_i32 : i32
    %1 = tpu.iota {dimensions = array<i32: 0>} : vector<2x1024xi32>
    %2 = tpu.iota {dimensions = array<i32: 1>} : vector<2x1024xi32>
    %c1024_i32 = arith.constant 1024 : i32
    %3 = vector.broadcast %c1024_i32 : i32 to vector<2x1024xi32>
    %4 = arith.muli %1, %3 : vector<2x1024xi32>
    %5 = vector.broadcast %0 : i32 to vector<2x1024xi32>
    %6 = arith.addi %5, %4 : vector<2x1024xi32>
    %7 = arith.addi %6, %2 : vector<2x1024xi32>
    %c0 = arith.constant 0 : index
    %8 = memref.load %arg1[%c0] : memref<1xi32, #tpu.memory_space<smem>>
    %c-1640531527_i32 = arith.constant -1640531527 : i32
    %9 = arith.muli %8, %c-1640531527_i32 : i32
    %10 = vector.broadcast %9 : i32 to vector<2x1024xi32>
    %11 = arith.addi %7, %10 : vector<2x1024xi32>
    %c16_i32 = arith.constant 16 : i32
    %12 = vector.broadcast %c16_i32 : i32 to vector<2x1024xi32>
    %13 = arith.shrui %11, %12 : vector<2x1024xi32>
    %14 = arith.xori %11, %13 : vector<2x1024xi32>
    %c2146121005_i32 = arith.constant 2146121005 : i32
    %15 = vector.broadcast %c2146121005_i32 : i32 to vector<2x1024xi32>
    %16 = arith.muli %14, %15 : vector<2x1024xi32>
    %c15_i32 = arith.constant 15 : i32
    %17 = vector.broadcast %c15_i32 : i32 to vector<2x1024xi32>
    %18 = arith.shrui %16, %17 : vector<2x1024xi32>
    %19 = arith.xori %16, %18 : vector<2x1024xi32>
    %c-2073254261_i32 = arith.constant -2073254261 : i32
    %20 = vector.broadcast %c-2073254261_i32 : i32 to vector<2x1024xi32>
    %21 = arith.muli %19, %20 : vector<2x1024xi32>
    %c16_i32_0 = arith.constant 16 : i32
    %22 = vector.broadcast %c16_i32_0 : i32 to vector<2x1024xi32>
    %23 = arith.shrui %21, %22 : vector<2x1024xi32>
    %24 = arith.xori %21, %23 : vector<2x1024xi32>
    %c-1073741824_i32 = arith.constant -1073741824 : i32
    %25 = vector.broadcast %c-1073741824_i32 : i32 to vector<2x1024xi32>
    %26 = arith.cmpi ult, %24, %25 : vector<2x1024xi32>
    %c0_1 = arith.constant 0 : index
    %c0_2 = arith.constant 0 : index
    %27 = vector.load %arg2[%c0_1, %c0_2] : memref<2x1024xf32, #tpu.memory_space<vmem>>, vector<2x1024xf32>
    %cst = arith.constant 1.33333337 : f32
    %28 = vector.broadcast %cst : f32 to vector<2x1024xf32>
    %29 = arith.mulf %27, %28 : vector<2x1024xf32>
    %cst_3 = arith.constant 0.000000e+00 : f32
    %30 = vector.broadcast %cst_3 : f32 to vector<2x1024xf32>
    %31 = arith.select %26, %29, %30 : vector<2x1024xi1>, vector<2x1024xf32>
    %c0_4 = arith.constant 0 : index
    %c0_5 = arith.constant 0 : index
    %32 = vector.load %arg3[%c0_4, %c0_5] : memref<2x1024xf32, #tpu.memory_space<vmem>>, vector<2x1024xf32>
    tpu.vector_store %arg3[%c0_4, %c0_5], %31 {strides = array<i32>} : memref<2x1024xf32, #tpu.memory_space<vmem>>, vector<2x1024xf32>,
    return
  }
  func.func @transform_0(%arg0: i32) -> i32 {
    %c0_i32 = arith.constant 0 : i32
    %c0_i32_0 = arith.constant 0 : i32
    return %c0_i32 : i32
  }
  func.func @transform_1(%arg0: i32) -> (i32, i32) {
    %c0_i32 = arith.constant 0 : i32
    %c0_i32_0 = arith.constant 0 : i32
    return %arg0, %c0_i32 : i32, i32
  }
  func.func @transform_2(%arg0: i32) -> (i32, i32) {
    %c0_i32 = arith.constant 0 : i32
    %c0_i32_0 = arith.constant 0 : i32
    return %arg0, %c0_i32 : i32, i32
  }
}

</mosaic_0001>

<llo_original>
// kernel: tpu_custom_call.1
$region0: #{tpu_custom_call.1}
  #allocation0 [shape = 'u32[]', space=smem, size = 0x4, offset = 0x4, fixed_abs, tag = 'smem constant byte address 0x4 - core index']
  #allocation1 [shape = 'u32[144,128]{1,0:T(1,128)}', space=vmem, size = 0x12000, scoped, tag = 'internal scratch']
  #allocation2 [shape = 's32[1]{0:T(128)S(6)}', space=smem, size = 0x200, scoped, tag = 'scoped memory for tpu_custom_call.1']
  %s0 = inlined_call_operand.<no memory space> [shape: s32[1], index: 0, kind: input, shape index: {}]
  %s1 = inlined_call_operand.hbm [shape: f32[2,1024], index: 1, kind: input, shape index: {}, may-alias: {1,2}]
  %s2 = inlined_call_operand.hbm [shape: f32[2,1024], index: 2, kind: output, shape index: {}, may-alias: {1,2}]
  %s3 = sld [smem:[#allocation0]]
  $region22: #{tpu_custom_call.1} parent=0
    _
  %s5 = ssub.s32 1, %s3
  %s6 = scalar_select 0, %s5, %s3
  %7 = sst [smem:[#allocation2]] %s0
  $region1: #{tpu_custom_call.1} parent=0
    #allocation3 [shape = 'u8[8192]{0}', space=vmem, size = 0x2000, scoped, tag = 'input window, operand 1, single buffered']
    #allocation4 [shape = 's32[1]{0}', space=sflag, size = 0x4, scoped, tag = 'scoped memory for tpu_custom_call.1']
    #allocation5 [shape = 's32[1]{0}', space=sflag, size = 0x4, scoped, tag = 'scoped memory for tpu_custom_call.1']
    #allocation6 [shape = 'u8[8192]{0}', space=vmem, size = 0x2000, scoped, tag = 'output window, operand 0, single buffered']
    %8 = vsyncpa [#allocation4], 0
    %9 = vsyncpa [#allocation5], 0
    // Predicated region
    $region2: #{tpu_custom_call.1} parent=1 // pred_check
      _
    $region3: #{tpu_custom_call.1} parent=1 // pred_check_branch
      %11 = sbr.rel (0) target = $region5
    $region4: #{tpu_custom_call.1} parent=1 // pred_region
      _
    $region5: #{tpu_custom_call.1} parent=1 // pred_fallthru
      _
    // Predicated region
    $region6: #{tpu_custom_call.1} parent=1 // pred_check
      _
    $region7: #{tpu_custom_call.1} parent=1 // pred_check_branch
      %13 = sbr.rel (0) target = $region9
    $region8: #{tpu_custom_call.1} parent=1 // pred_region
      %s15 = ssub.s32 256, 256
      %16 = vsyncadd [#allocation4], %s15
      %s18 = sshll.u32 [#allocation3], 4
      %s19 = int_to_ptr.vmem [resolvable:$true] %s18
      %21 = dma.hbm_to_vmem [thread:$0]  %s1, 256, %s19, [#allocation4]
    $region9: #{tpu_custom_call.1} parent=1 // pred_fallthru
      _
    // Predicated region
    $region10: #{tpu_custom_call.1} parent=1 // pred_check
      _
    $region11: #{tpu_custom_call.1} parent=1 // pred_check_branch
      %23 = sbr.rel (0) target = $region13
    $region12: #{tpu_custom_call.1} parent=1 // pred_region
      %24 = dma.done [#allocation4], 256
    $region13: #{tpu_custom_call.1} parent=1 // pred_fallthru
      _
    %s25 = smul.u32 0, 2048
    %v26 = vlaneseq
    %v27 = vshrl.u32 %v26, 7
    %v28 = vlaneseq
    %v29 = vand.u32 %v28, 127
    %v30 = vadd.s32 %v29, 128
    %v31 = vadd.s32 %v29, 256
    %v32 = vadd.s32 %v29, 384
    %v33 = vadd.s32 %v29, 512
    %v34 = vadd.s32 %v29, 640
    %v35 = vadd.s32 %v29, 768
    %v36 = vadd.s32 %v29, 896
    %v37 = vmul.u32 %v27, 1024
    %v38 = vstv %s25
    %v39 = vadd.s32 %v38, %v37
    %v40 = vadd.s32 %v39, %v29
    %v41 = vadd.s32 %v39, %v30
    %v42 = vadd.s32 %v39, %v31
    %v43 = vadd.s32 %v39, %v32
    %v44 = vadd.s32 %v39, %v33
    %v45 = vadd.s32 %v39, %v34
    %v46 = vadd.s32 %v39, %v35
    %v47 = vadd.s32 %v39, %v36
    %s48 = sld [smem:[#allocation2]]
    %s49 = smul.u32 %s48, 2654435769
    %v50 = vstv %s49
    %v51 = vadd.s32 %v40, %v50
    %v52 = vadd.s32 %v41, %v50
    %v53 = vadd.s32 %v42, %v50
    %v54 = vadd.s32 %v43, %v50
    %v55 = vadd.s32 %v44, %v50
    %v56 = vadd.s32 %v45, %v50
    %v57 = vadd.s32 %v46, %v50
    %v58 = vadd.s32 %v47, %v50
    %v59 = vshrl.u32 %v51, 16
    %v60 = vshrl.u32 %v52, 16
    %v61 = vshrl.u32 %v53, 16
    %v62 = vshrl.u32 %v54, 16
    %v63 = vshrl.u32 %v55, 16
    %v64 = vshrl.u32 %v56, 16
    %v65 = vshrl.u32 %v57, 16
    %v66 = vshrl.u32 %v58, 16
    %v67 = vxor.u32 %v51, %v59
    %v68 = vxor.u32 %v52, %v60
    %v69 = vxor.u32 %v53, %v61
    %v70 = vxor.u32 %v54, %v62
    %v71 = vxor.u32 %v55, %v63
    %v72 = vxor.u32 %v56, %v64
    %v73 = vxor.u32 %v57, %v65
    %v74 = vxor.u32 %v58, %v66
    %v75 = vmul.u32 %v67, 2146121005
    %v76 = vmul.u32 %v68, 2146121005
    %v77 = vmul.u32 %v69, 2146121005
    %v78 = vmul.u32 %v70, 2146121005
    %v79 = vmul.u32 %v71, 2146121005
    %v80 = vmul.u32 %v72, 2146121005
    %v81 = vmul.u32 %v73, 2146121005
    %v82 = vmul.u32 %v74, 2146121005
    %v83 = vshrl.u32 %v75, 15
    %v84 = vshrl.u32 %v76, 15
    %v85 = vshrl.u32 %v77, 15
    %v86 = vshrl.u32 %v78, 15
    %v87 = vshrl.u32 %v79, 15
    %v88 = vshrl.u32 %v80, 15
    %v89 = vshrl.u32 %v81, 15
    %v90 = vshrl.u32 %v82, 15
    %v91 = vxor.u32 %v75, %v83
    %v92 = vxor.u32 %v76, %v84
    %v93 = vxor.u32 %v77, %v85
    %v94 = vxor.u32 %v78, %v86
    %v95 = vxor.u32 %v79, %v87
    %v96 = vxor.u32 %v80, %v88
    %v97 = vxor.u32 %v81, %v89
    %v98 = vxor.u32 %v82, %v90
    %v99 = vmul.u32 %v91, 2221713035
    %v100 = vmul.u32 %v92, 2221713035
    %v101 = vmul.u32 %v93, 2221713035
    %v102 = vmul.u32 %v94, 2221713035
    %v103 = vmul.u32 %v95, 2221713035
    %v104 = vmul.u32 %v96, 2221713035
    %v105 = vmul.u32 %v97, 2221713035
    %v106 = vmul.u32 %v98, 2221713035
    %v107 = vshrl.u32 %v99, 16
    %v108 = vshrl.u32 %v100, 16
    %v109 = vshrl.u32 %v101, 16
    %v110 = vshrl.u32 %v102, 16
    %v111 = vshrl.u32 %v103, 16
    %v112 = vshrl.u32 %v104, 16
    %v113 = vshrl.u32 %v105, 16
    %v114 = vshrl.u32 %v106, 16
    %v115 = vxor.u32 %v99, %v107
    %v116 = vxor.u32 %v100, %v108
    %v117 = vxor.u32 %v101, %v109
    %v118 = vxor.u32 %v102, %v110
    %v119 = vxor.u32 %v103, %v111
    %v120 = vxor.u32 %v104, %v112
    %v121 = vxor.u32 %v105, %v113
    %v122 = vxor.u32 %v106, %v114
    %vm123 = vcmp.lt.u32.totalorder %v115, 3221225472
    %vm124 = vcmp.lt.u32.totalorder %v116, 3221225472
    %vm125 = vcmp.lt.u32.totalorder %v117, 3221225472
    %vm126 = vcmp.lt.u32.totalorder %v118, 3221225472
    %vm127 = vcmp.lt.u32.totalorder %v119, 3221225472
    %vm128 = vcmp.lt.u32.totalorder %v120, 3221225472
    %vm129 = vcmp.lt.u32.totalorder %v121, 3221225472
    %vm130 = vcmp.lt.u32.totalorder %v122, 3221225472
    %v131 = vld [vmem:[#allocation3] sm:$0xff]
    %v132 = vld [vmem:[#allocation3 + $0x8] sm:$0xff]
    %v133 = vmul.f32 %v131, 1.3333334
    %v134 = vmul.f32 %v132, 1.3333334
    %v137 = vcombine.high %v133, %v133
    %v139 = vunpack.c.l.s4 1983009808
    %v140 = vunpack.c.0.s8 %v139
    %v141 = vlaneseq
    %v142 = vshrl.u32 %v141, 7
    %v143 = vsub.s32 %v140, %v142
    %v144 = vrot.slane %v133, %v143
    %v146 = vunpack.c.l.s4 1983009808
    %v147 = vunpack.c.0.s8 %v146
    %v148 = vlaneseq
    %v149 = vshrl.u32 %v148, 7
    %v150 = vsub.s32 %v147, %v149
    %v151 = vrot.slane %v137, %v150
    %v152 = vcombine.high %v144, %v144
    %v153 = vcombine.high %v151, %v151
    %v154 = vcombine.high %v134, %v134
    %v156 = vunpack.c.l.s4 1983009808
    %v157 = vunpack.c.0.s8 %v156
    %v158 = vlaneseq
    %v159 = vshrl.u32 %v158, 7
    %v160 = vsub.s32 %v157, %v159
    %v161 = vrot.slane %v134, %v160
    %v163 = vunpack.c.l.s4 1983009808
    %v164 = vunpack.c.0.s8 %v163
    %v165 = vlaneseq
    %v166 = vshrl.u32 %v165, 7
    %v167 = vsub.s32 %v164, %v166
    %v168 = vrot.slane %v154, %v167
    %v169 = vcombine.high %v161, %v161
    %v170 = vcombine.high %v168, %v168
    %v179 = vsel %vm123, %v144, 0.0
    %v180 = vsel %vm124, %v152, 0.0
    %v181 = vsel %vm125, %v151, 0.0
    %v182 = vsel %vm126, %v153, 0.0
    %v183 = vsel %vm127, %v161, 0.0
    %v184 = vsel %vm128, %v169, 0.0
    %v185 = vsel %vm129, %v168, 0.0
    %v186 = vsel %vm130, %v170, 0.0
    %v195 = vcombine.low %v179, %v180
    %v196 = vcombine.low %v181, %v182
    %v198 = vunpack.c.l.s4 1983009808
    %v199 = vunpack.c.0.s8 %v198
    %v200 = vlaneseq
    %v201 = vshrl.u32 %v200, 7
    %v202 = vsub.s32 %v199, %v201
    %v203 = vrot.slane %v195, %v202
    %v205 = vunpack.c.l.s4 1983009808
    %v206 = vunpack.c.0.s8 %v205
    %v207 = vlaneseq
    %v208 = vshrl.u32 %v207, 7
    %v209 = vsub.s32 %v206, %v208
    %v210 = vrot.slane %v196, %v209
    %v211 = vcombine.low %v203, %v210
    %v212 = vcombine.low %v183, %v184
    %v213 = vcombine.low %v185, %v186
    %v215 = vunpack.c.l.s4 1983009808
    %v216 = vunpack.c.0.s8 %v215
    %v217 = vlaneseq
    %v218 = vshrl.u32 %v217, 7
    %v219 = vsub.s32 %v216, %v218
    %v220 = vrot.slane %v212, %v219
    %v222 = vunpack.c.l.s4 1983009808
    %v223 = vunpack.c.0.s8 %v222
    %v224 = vlaneseq
    %v225 = vshrl.u32 %v224, 7
    %v226 = vsub.s32 %v223, %v225
    %v227 = vrot.slane %v213, %v226
    %v228 = vcombine.low %v220, %v227
    %231 = vst [vmem:[#allocation6] sm:$0xff] %v211
    %232 = vst [vmem:[#allocation6 + $0x8] sm:$0xff] %v228
    // Predicated region
    $region14: #{tpu_custom_call.1} parent=1 // pred_check
      _
    $region15: #{tpu_custom_call.1} parent=1 // pred_check_branch
      %234 = sbr.rel (0) target = $region17
    $region16: #{tpu_custom_call.1} parent=1 // pred_region
      %s236 = ssub.s32 256, 256
      %237 = vsyncadd [#allocation5], %s236
      %s239 = sshll.u32 [#allocation6], 4
      %s240 = int_to_ptr.vmem [resolvable:$true] %s239
      %242 = dma.vmem_to_hbm [thread:$0]  %s240, 256, %s2, [#allocation5]
    $region17: #{tpu_custom_call.1} parent=1 // pred_fallthru
      _
    // Predicated region
    $region18: #{tpu_custom_call.1} parent=1 // pred_check
      _
    $region19: #{tpu_custom_call.1} parent=1 // pred_check_branch
      %244 = sbr.rel (0) target = $region21
    $region20: #{tpu_custom_call.1} parent=1 // pred_region
      %245 = dma.done [#allocation5], 256
    $region21: #{tpu_custom_call.1} parent=1 // pred_fallthru
      _
    %246 = vsyncpa [#allocation4], 1
    %247 = vsyncpa [#allocation5], 1

</llo_original>
